<compile_context>
chip_gen: v7x
topology: tpu7x:2x2x1
jax: 0.10.0
libtpu: 0.0.40
codegen_flags: <defaults>
</compile_context>

<pallas_src>
import functools

import jax
import jax.numpy as jnp
from jax import lax
from jax.experimental import pallas as pl
from jax.experimental.pallas import tpu as pltpu


# Large negative instead of -inf so flash-style rescaling never produces inf - inf = nan
# when a whole KV tile is masked out for some row.  NOTE: rows with *zero* valid keys get a
# finite (mean-of-V-like) output instead of NaN; callers must guarantee >= 1 valid key/row.
_MASK_VALUE = -1e30


def _pick_tile(dim, candidates):
    """Largest candidate tile that evenly divides `dim`, else the full dim (a full-dim
    block always satisfies the (8,128) block-shape rule)."""
    for c in candidates:
        if dim % c == 0:
            return c
    return dim


# ------------------------- tiled linear: y = x @ w + b ------------------------- #

def _linear_kernel(x_ref, w_ref, b_ref, o_ref, acc_ref):
    @pl.when(pl.program_id(2) == 0)
    def _():
        acc_ref[...] = jnp.zeros_like(acc_ref)

    # MXU runs in the activation dtype (bf16 when bf16 inputs are fed), f32 accumulation.
    acc_ref[...] += jnp.dot(x_ref[...], w_ref[...],
                            preferred_element_type=jnp.float32)

    @pl.when(pl.program_id(2) == pl.num_programs(2) - 1)
    def _():
        o_ref[...] = (acc_ref[...] + b_ref[...].astype(jnp.float32)).astype(o_ref.dtype)


def pallas_linear(x, w, b):
    """y = x @ w + b with a (M//tm, Nout//tn, K//tk) grid, f32 VMEM accumulator and
    double-buffered (software-pipelined) HBM traffic."""
    M, K = x.shape
    _, Nout = w.shape
    tm = _pick_tile(M, (512, 256, 128))
    tn = _pick_tile(Nout, (256, 128))
    tk = _pick_tile(K, (512, 256, 128))
    grid = (M // tm, Nout // tn, K // tk)
    return pl.pallas_call(
        _linear_kernel,
        out_shape=jax.ShapeDtypeStruct((M, Nout), x.dtype),
        grid=grid,
        in_specs=[
            pl.BlockSpec((tm, tk), lambda i, j, k: (i, k)),
            pl.BlockSpec((tk, tn), lambda i, j, k: (k, j)),
            pl.BlockSpec((1, tn), lambda i, j, k: (0, j)),
        ],
        out_specs=pl.BlockSpec((tm, tn), lambda i, j, k: (i, j)),
        scratch_shapes=[pltpu.VMEM((tm, tn), jnp.float32)],
        compiler_params=pltpu.CompilerParams(
            dimension_semantics=("parallel", "parallel", "arbitrary")),
        cost_estimate=pl.CostEstimate(
            flops=2 * M * K * Nout,
            transcendentals=0,
            bytes_accessed=(M * K + K * Nout + M * Nout + Nout) * x.dtype.itemsize),
    )(x, w, b.reshape(1, Nout))


# ------------------- flash-style attention kernel (one head / program) ------------------- #

def _flash_kernel(*refs, has_mask):
    if has_mask:
        q_ref, k_ref, v_ref, bias_ref, o_ref, m_sc, l_sc, acc_sc = refs
    else:
        q_ref, k_ref, v_ref, o_ref, m_sc, l_sc, acc_sc = refs
        bias_ref = None

    ki = pl.program_id(2)

    @pl.when(ki == 0)
    def _():
        m_sc[...] = jnp.full(m_sc.shape, -jnp.inf, jnp.float32)
        l_sc[...] = jnp.zeros(l_sc.shape, jnp.float32)
        acc_sc[...] = jnp.zeros(acc_sc.shape, jnp.float32)

    q = q_ref[...]                                   # (tq, D); 1/sqrt(D) already folded into W_q
    k = k_ref[...]                                   # (tk, D)
    # q @ k^T contracting the last dims of both operands — no transposed K tile, MXU in the
    # activation dtype (bf16 when bf16 is fed), f32 accumulation.
    s = lax.dot_general(q, k, (((1,), (1,)), ((), ())),
                        preferred_element_type=jnp.float32)        # (tq, tk) f32
    if has_mask:
        s = s + bias_ref[...].astype(jnp.float32)    # (1, tk): 0 keep / -1e30 drop, bcast over rows

    # Online softmax; statistics stay in f32 for stability on every chip generation.
    m_prev = m_sc[...]
    m_new = jnp.maximum(m_prev, jnp.max(s, axis=-1, keepdims=True))
    alpha = jnp.exp(m_prev - m_new)
    p = jnp.exp(s - m_new)
    l_sc[...] = alpha * l_sc[...] + jnp.sum(p, axis=-1, keepdims=True)
    # Un-normalized P @ V — normalization deferred to the (tq, D) accumulator.
    acc_sc[...] = alpha * acc_sc[...] + jnp.dot(p.astype(v_ref.dtype), v_ref[...],
                                                preferred_element_type=jnp.float32)
    m_sc[...] = m_new

    @pl.when(ki == pl.num_programs(2) - 1)
    def _():
        # Deferred normalization on (tq, D), once per q-block.  Exact reciprocal keeps the
        # f32 1e-5 check; approx=True moves it onto the EUP when tolerance allows.
        inv = pl.reciprocal(l_sc[...], approx=False)
        o_ref[...] = (acc_sc[...] * inv).astype(o_ref.dtype)


def pallas_flash_attention(q, k, v, bias_row, *, num_heads):
    """softmax(q k^T [+ mask]) v, one (batch, head) pair per program.

    q, k, v:   (B*H, N, D)  — per-head slabs, last dim == full array dim (lane-dense blocks)
    bias_row:  None or (B, 1, N) additive f32 row (0 / -1e30)
    Output:    (B*H, N, D)
    """
    BH, N, D = q.shape
    H = num_heads
    # q/acc resident per program is only (tq, D): a large tq is cheap and halves KV
    # re-streaming from HBM (matters most on v5e's lower HBM bandwidth).
    tq = _pick_tile(N, (512, 256, 128))
    tk = _pick_tile(N, (512, 256, 128))
    has_mask = bias_row is not None
    kernel = functools.partial(_flash_kernel, has_mask=has_mask)

    in_specs = [
        pl.BlockSpec((None, tq, D), lambda b, qi, ki: (b, qi, 0)),   # q: resident over ki
        pl.BlockSpec((None, tk, D), lambda b, qi, ki: (b, ki, 0)),   # k: streamed
        pl.BlockSpec((None, tk, D), lambda b, qi, ki: (b, ki, 0)),   # v: streamed
    ]
    inputs = [q, k, v]
    if has_mask:
        in_specs.append(
            pl.BlockSpec((None, 1, tk), lambda b, qi, ki: (b // H, 0, ki)))
        inputs.append(bias_row)

    return pl.pallas_call(
        kernel,
        out_shape=jax.ShapeDtypeStruct((BH, N, D), q.dtype),
        grid=(BH, N // tq, N // tk),
        in_specs=in_specs,
        out_specs=pl.BlockSpec((None, tq, D), lambda b, qi, ki: (b, qi, 0)),
        scratch_shapes=[
            pltpu.VMEM((tq, 1), jnp.float32),   # running max
            pltpu.VMEM((tq, 1), jnp.float32),   # running denom
            pltpu.VMEM((tq, D), jnp.float32),   # un-normalized output accumulator
        ],
        compiler_params=pltpu.CompilerParams(
            dimension_semantics=("parallel", "parallel", "arbitrary")),
        cost_estimate=pl.CostEstimate(
            flops=4 * BH * N * N * D,
            transcendentals=BH * N * N,
            bytes_accessed=(2 * q.size + (N // tq) * (k.size + v.size)) * q.dtype.itemsize),
    )(*inputs)


# ------------------------------ module wrapper ------------------------------ #

def init_attention_params(key, dim, num_heads=8):
    assert dim % num_heads == 0
    k1, k2, k3, k4 = jax.random.split(key, 4)
    # Stored as (in, out) so the kernels compute x @ W directly
    # (PyTorch nn.Linear stores (out, in) and does x @ W.T — same math).
    return {
        "w_qkv": jax.random.normal(k1, (dim, 3 * dim), jnp.float32) * 0.02,
        "b_qkv": jax.random.normal(k2, (3 * dim,), jnp.float32) * 0.02,
        "w_proj": jax.random.normal(k3, (dim, dim), jnp.float32) * 0.02,
        "b_proj": jax.random.normal(k4, (dim,), jnp.float32) * 0.02,
    }


def attention_forward(params, x, mask=None, *, num_heads=8):
    """Eval-mode forward of the Attention module (dropout disabled).

    Feed bf16 `x`/params for bf16 MXU inputs (f32 accumulation and f32 softmax math are
    kept inside the kernels); feed f32 for reference-exact numerics.
    """
    B, N, C = x.shape
    H = num_heads
    D = C // H
    scale = D ** (-0.5)

    # Fold 1/sqrt(D) into the q columns of the fused qkv projection (free at trace time;
    # removes all per-KV-step scale multiplies from the attention kernel).
    w_qkv, b_qkv = params["w_qkv"], params["b_qkv"]
    col_scale = jnp.concatenate(
        [jnp.full((C,), scale, jnp.float32), jnp.ones((2 * C,), jnp.float32)]
    ).astype(w_qkv.dtype)
    w_qkv = w_qkv * col_scale
    b_qkv = b_qkv * col_scale

    # One fused qkv GEMM: x read from HBM once, output channel layout [3][H][D].
    x_flat = x.reshape(B * N, C)
    qkv = pallas_linear(x_flat, w_qkv, b_qkv)                       # (B*N, 3C)

    # Layout plumbing (single XLA transpose): per-head (B*H, N, D) slabs so every attention
    # block is lane-dense with last dim == the full array dim.
    qkv = qkv.reshape(B, N, 3, H, D).transpose(2, 0, 3, 1, 4)       # (3, B, H, N, D)
    q = qkv[0].reshape(B * H, N, D)
    k = qkv[1].reshape(B * H, N, D)
    v = qkv[2].reshape(B * H, N, D)
    # q_norm / k_norm are nn.Identity (qk_norm=False default).

    # mask: (B, N) boolean, True = attend.  Only a (B, 1, N) additive row goes to the
    # kernel; the (B, N, N) bias is never materialized.
    if mask is None:
        bias_row = None
    else:
        bias_row = jnp.where(mask.astype(bool), 0.0, _MASK_VALUE)
        bias_row = bias_row.astype(jnp.float32).reshape(B, 1, N)

    o = pallas_flash_attention(q, k, v, bias_row, num_heads=H)      # (B*H, N, D)

    # Back to (token, channel) layout for the output projection.
    o = o.reshape(B, H, N, D).transpose(0, 2, 1, 3).reshape(B * N, C)
    out = pallas_linear(o, params["w_proj"], params["b_proj"])
    # attn_drop / proj_drop: identity in eval mode.
    return out.reshape(B, N, C)


# ------------------------------ pure-JAX reference --------------------------- #

def attention_reference(params, x, mask=None, *, num_heads=8):
    B, N, C = x.shape
    H = num_heads
    D = C // H
    qkv = x.reshape(B * N, C) @ params["w_qkv"] + params["b_qkv"]
    qkv = qkv.reshape(B, N, 3, H, D).transpose(2, 0, 3, 1, 4)
    q, k, v = qkv[0], qkv[1], qkv[2]
    s = jnp.einsum("bhqd,bhkd->bhqk", q, k) * (D ** -0.5)
    if mask is not None:
        m = mask.reshape(B, 1, 1, N).astype(bool)
        s = jnp.where(m, s, -jnp.inf)
    attn = jax.nn.softmax(s, axis=-1)
    o = jnp.einsum("bhqk,bhkd->bhqd", attn, v)
    o = o.transpose(0, 2, 1, 3).reshape(B * N, C)
    out = o @ params["w_proj"] + params["b_proj"]
    return out.reshape(B, N, C)


# ----------------------------------- main ----------------------------------- #

if __name__ == "__main__":
    B, N, C = 2, 8, 32
    num_heads = 8

    key = jax.random.PRNGKey(0)
    kx, kp = jax.random.split(key)
    x = jax.random.normal(kx, (B, N, C), dtype=jnp.float32)
    params = init_attention_params(kp, C, num_heads)

    # f32 path: exact against the reference.
    out = jax.block_until_ready(attention_forward(params, x, mask=None, num_heads=num_heads))
    ref = attention_reference(params, x, mask=None, num_heads=num_heads)
    assert out.shape == (B, N, C)
    assert jnp.allclose(out, ref, rtol=1e-5, atol=1e-5), "mismatch vs reference (no mask)"

    # Masked f32 path (every query row keeps at least one valid key).
    mask = jnp.ones((B, N), dtype=bool).at[:, -3:].set(False)
    out_m = jax.block_until_ready(attention_forward(params, x, mask=mask, num_heads=num_heads))
    ref_m = attention_reference(params, x, mask=mask, num_heads=num_heads)
    assert jnp.allclose(out_m, ref_m, rtol=1e-5, atol=1e-5), "mismatch vs reference (mask)"

    # bf16 MXU path (f32 accumulation / f32 softmax stats inside the kernels).
    params_bf = jax.tree_util.tree_map(lambda a: a.astype(jnp.bfloat16), params)
    x_bf = x.astype(jnp.bfloat16)
    out_bf = jax.block_until_ready(
        attention_forward(params_bf, x_bf, mask=None, num_heads=num_heads))
    params_bf32 = jax.tree_util.tree_map(lambda a: a.astype(jnp.float32), params_bf)
    ref_bf = attention_reference(params_bf32, x_bf.astype(jnp.float32), mask=None,
                                 num_heads=num_heads)
    assert out_bf.dtype == jnp.bfloat16
    assert jnp.allclose(out_bf.astype(jnp.float32), ref_bf, rtol=3e-2, atol=1e-2), \
        "mismatch vs reference (bf16)"

    print("KERNEL_OK")
</pallas_src>

<mosaic_0001>
module attributes {stable_mosaic.version = 11 : i64} {
  func.func @_linear_kernel(%arg0: i32, %arg1: i32, %arg2: i32, %arg3: memref<16x32xf32, #tpu.memory_space<vmem>>, %arg4: memref<32x96xf32, #tpu.memory_space<vmem>>, %arg5: memref<1x96xf32, #tpu.memory_space<vmem>>, %arg6: memref<16x96xf32, #tpu.memory_space<vmem>>, %arg7: memref<16x96xf32, #tpu.memory_space<vmem>>) attributes {dimension_semantics = [#tpu.dimension_semantics<parallel>, #tpu.dimension_semantics<parallel>, #tpu.dimension_semantics<arbitrary>], iteration_bounds = array<i64: 1, 1, 1>, scalar_prefetch = 0 : i64, scratch_operands = 1 : i64, tpu.core_type = #tpu.core_type<tc>, window_params = [{transform_indices = @transform_0, window_bounds = array<i64: 16, 32>}, {transform_indices = @transform_1, window_bounds = array<i64: 32, 96>}, {transform_indices = @transform_2, window_bounds = array<i64: 1, 96>}, {transform_indices = @transform_3, window_bounds = array<i64: 16, 96>}]} {
    %c0_i32 = arith.constant 0 : i32
    %0 = arith.cmpi eq, %arg2, %c0_i32 : i32
    %1 = arith.extui %0 : i1 to i32
    %c0_i32_0 = arith.constant 0 : i32
    %2 = arith.cmpi ne, %1, %c0_i32_0 : i32
    scf.if %2 {
      %cst_10 = arith.constant 0.000000e+00 : f32
      %12 = vector.broadcast %cst_10 : f32 to vector<16x96xf32>
      %c0_11 = arith.constant 0 : index
      %c0_12 = arith.constant 0 : index
      %13 = vector.load %arg7[%c0_11, %c0_12] : memref<16x96xf32, #tpu.memory_space<vmem>>, vector<16x96xf32>
      tpu.vector_store %arg7[%c0_11, %c0_12], %12 {strides = array<i32>} : memref<16x96xf32, #tpu.memory_space<vmem>>, vector<16x96xf32>,
    } else {
    }
    %c0 = arith.constant 0 : index
    %c0_1 = arith.constant 0 : index
    %3 = vector.load %arg7[%c0, %c0_1] : memref<16x96xf32, #tpu.memory_space<vmem>>, vector<16x96xf32>
    %c0_2 = arith.constant 0 : index
    %c0_3 = arith.constant 0 : index
    %4 = vector.load %arg3[%c0_2, %c0_3] : memref<16x32xf32, #tpu.memory_space<vmem>>, vector<16x32xf32>
    %c0_4 = arith.constant 0 : index
    %c0_5 = arith.constant 0 : index
    %5 = vector.load %arg4[%c0_4, %c0_5] : memref<32x96xf32, #tpu.memory_space<vmem>>, vector<32x96xf32>
    %cst = arith.constant dense<0.000000e+00> : vector<16x96xf32>
    %6 = tpu.matmul %4, %5, %cst {dimension_numbers = #tpu.dot_dimension_numbers<[1], [0], [0], [1], [0, 0, 1, 1], [], []>} : vector<16x32xf32>, vector<32x96xf32>, vector<16x96xf32> -> vector<16x96xf32>
    %7 = arith.addf %3, %6 : vector<16x96xf32>
    %c0_6 = arith.constant 0 : index
    %c0_7 = arith.constant 0 : index
    %8 = vector.load %arg7[%c0_6, %c0_7] : memref<16x96xf32, #tpu.memory_space<vmem>>, vector<16x96xf32>
    tpu.vector_store %arg7[%c0_6, %c0_7], %7 {strides = array<i32>} : memref<16x96xf32, #tpu.memory_space<vmem>>, vector<16x96xf32>,
    %c0_i32_8 = arith.constant 0 : i32
    %9 = arith.cmpi eq, %arg2, %c0_i32_8 : i32
    %10 = arith.extui %9 : i1 to i32
    %c0_i32_9 = arith.constant 0 : i32
    %11 = arith.cmpi ne, %10, %c0_i32_9 : i32
    scf.if %11 {
      %c0_10 = arith.constant 0 : index
      %c0_11 = arith.constant 0 : index
      %12 = vector.load %arg7[%c0_10, %c0_11] : memref<16x96xf32, #tpu.memory_space<vmem>>, vector<16x96xf32>
      %c0_12 = arith.constant 0 : index
      %c0_13 = arith.constant 0 : index
      %13 = vector.load %arg5[%c0_12, %c0_13] : memref<1x96xf32, #tpu.memory_space<vmem>>, vector<1x96xf32>
      %14 = vector.broadcast %13 : vector<1x96xf32> to vector<16x96xf32>
      %15 = arith.addf %12, %14 : vector<16x96xf32>
      %c0_14 = arith.constant 0 : index
      %c0_15 = arith.constant 0 : index
      %16 = vector.load %arg6[%c0_14, %c0_15] : memref<16x96xf32, #tpu.memory_space<vmem>>, vector<16x96xf32>
      tpu.vector_store %arg6[%c0_14, %c0_15], %15 {strides = array<i32>} : memref<16x96xf32, #tpu.memory_space<vmem>>, vector<16x96xf32>,
    } else {
    }
    return
  }
  func.func @transform_0(%arg0: i32, %arg1: i32, %arg2: i32) -> (i32, i32) {
    %c0_i32 = arith.constant 0 : i32
    return %arg0, %arg2 : i32, i32
  }
  func.func @transform_1(%arg0: i32, %arg1: i32, %arg2: i32) -> (i32, i32) {
    %c0_i32 = arith.constant 0 : i32
    return %arg2, %arg1 : i32, i32
  }
  func.func @transform_2(%arg0: i32, %arg1: i32, %arg2: i32) -> (i32, i32) {
    %c0_i32 = arith.constant 0 : i32
    %c0_i32_0 = arith.constant 0 : i32
    return %c0_i32, %arg1 : i32, i32
  }
  func.func @transform_3(%arg0: i32, %arg1: i32, %arg2: i32) -> (i32, i32) {
    %c0_i32 = arith.constant 0 : i32
    return %arg0, %arg1 : i32, i32
  }
}

</mosaic_0001>

<llo_original>
// kernel: tpu_custom_call.1
$region0: #{tpu_custom_call.1}
  #allocation0 [shape = 'u32[]', space=smem, size = 0x4, offset = 0x4, fixed_abs, tag = 'smem constant byte address 0x4 - core index']
  #allocation1 [shape = 'u32[144,128]{1,0:T(1,128)}', space=vmem, size = 0x12000, scoped, tag = 'internal scratch']
  #allocation2 [shape = 'f32[16,96]{1,0:T(8,128)}', space=vmem, size = 0x2000, scoped, tag = 'scratch operand']
  %s0 = inlined_call_operand.hbm [shape: f32[16,32], index: 0, kind: input, shape index: {}]
  %s1 = inlined_call_operand.hbm [shape: f32[32,96], index: 1, kind: input, shape index: {}]
  %s2 = inlined_call_operand.vmem [shape: f32[1,96], index: 2, kind: input, shape index: {}]
  %s3 = inlined_call_operand.hbm [shape: f32[16,96], index: 3, kind: output, shape index: {}]
  %s4 = sld [smem:[#allocation0]]
  $region38: #{tpu_custom_call.1} parent=0
    _
  %s6 = ssub.s32 1, %s4
  %s7 = scalar_select 0, %s6, %s4
  $region1: #{tpu_custom_call.1} parent=0
    #allocation3 [shape = 'u8[8192]{0}', space=vmem, size = 0x2000, scoped, tag = 'input window, operand 0, single buffered']
    #allocation4 [shape = 's32[1]{0}', space=sflag, size = 0x4, scoped, tag = 'scoped memory for tpu_custom_call.1']
    #allocation5 [shape = 's32[1]{0}', space=sflag, size = 0x4, scoped, tag = 'scoped memory for tpu_custom_call.1']
    #allocation6 [shape = 'u8[16384]{0}', space=vmem, size = 0x4000, scoped, tag = 'input window, operand 1, single buffered']
    #allocation7 [shape = 's32[1]{0}', space=sflag, size = 0x4, scoped, tag = 'scoped memory for tpu_custom_call.1']
    #allocation8 [shape = 'u8[8192]{0}', space=vmem, size = 0x2000, scoped, tag = 'output window, operand 0, single buffered']
    %8 = vsyncpa [#allocation4], 0
    %9 = vsyncpa [#allocation7], 0
    %10 = vsyncpa [#allocation5], 0
    // Predicated region
    $region2: #{tpu_custom_call.1} parent=1 // pred_check
      _
    $region3: #{tpu_custom_call.1} parent=1 // pred_check_branch
      %12 = sbr.rel (0) target = $region5
    $region4: #{tpu_custom_call.1} parent=1 // pred_region
      %s14 = ssub.s32 256, 256
      %15 = vsyncadd [#allocation4], %s14
      %s16 = sshll.u32 [#allocation3], 4
      %s17 = int_to_ptr.vmem [resolvable:$true] %s16
      %22 = dma.hbm_to_vmem [thread:$0]  %s0, 256, %s17, [#allocation4], 128, 128, 8
    $region5: #{tpu_custom_call.1} parent=1 // pred_fallthru
      _
    // Predicated region
    $region6: #{tpu_custom_call.1} parent=1 // pred_check
      _
    $region7: #{tpu_custom_call.1} parent=1 // pred_check_branch
      %24 = sbr.rel (0) target = $region9
    $region8: #{tpu_custom_call.1} parent=1 // pred_region
      %s26 = ssub.s32 512, 512
      %27 = vsyncadd [#allocation7], %s26
      %s28 = sshll.u32 [#allocation6], 4
      %s29 = int_to_ptr.vmem [resolvable:$true] %s28
      %34 = dma.hbm_to_vmem [thread:$0]  %s1, 512, %s29, [#allocation7], 128, 128, 8
    $region9: #{tpu_custom_call.1} parent=1 // pred_fallthru
      _
    // Predicated region
    $region10: #{tpu_custom_call.1} parent=1 // pred_check
      _
    $region11: #{tpu_custom_call.1} parent=1 // pred_check_branch
      %36 = sbr.rel (0) target = $region13
    $region12: #{tpu_custom_call.1} parent=1 // pred_region
      _
    $region13: #{tpu_custom_call.1} parent=1 // pred_fallthru
      _
    // Predicated region
    $region14: #{tpu_custom_call.1} parent=1 // pred_check
      _
    $region15: #{tpu_custom_call.1} parent=1 // pred_check_branch
      %38 = sbr.rel (0) target = $region17
    $region16: #{tpu_custom_call.1} parent=1 // pred_region
      %39 = dma.done [#allocation4], 256
    $region17: #{tpu_custom_call.1} parent=1 // pred_fallthru
      _
    // Predicated region
    $region18: #{tpu_custom_call.1} parent=1 // pred_check
      _
    $region19: #{tpu_custom_call.1} parent=1 // pred_check_branch
      %41 = sbr.rel (0) target = $region21
    $region20: #{tpu_custom_call.1} parent=1 // pred_region
      %42 = dma.done [#allocation7], 512
    $region21: #{tpu_custom_call.1} parent=1 // pred_fallthru
      _
    %p43 = scmp.eq.s32.totalorder 0, 0
    // Predicated region
    $region22: #{tpu_custom_call.1} parent=1 // pred_check
      %p44 = pneg %p43
    $region23: #{tpu_custom_call.1} parent=1 // pred_check_branch
      %46 = sbr.rel (%p44) target = $region25
    $region24: #{tpu_custom_call.1} parent=1 // pred_region
      %vm47 = vcmask 785408
      %48 = vst.msk [vmem:[#allocation2] sm:$0xff] %vm47, 0.0
      %49 = vst.msk [vmem:[#allocation2 + $0x8] sm:$0xff] %vm47, 0.0
    $region25: #{tpu_custom_call.1} parent=1 // pred_fallthru
      _
    %v50 = vld [vmem:[#allocation2] sm:$0xff]
    %v51 = vld [vmem:[#allocation2 + $0x8] sm:$0xff]
    %v52 = vld [vmem:[#allocation3] sm:$0xff]
    %v53 = vld [vmem:[#allocation3 + $0x8] sm:$0xff]
    %v54 = vld [vmem:[#allocation6] sm:$0xff]
    %v55 = vld [vmem:[#allocation6 + $0x8] sm:$0xff]
    %v56 = vld [vmem:[#allocation6 + $0x10] sm:$0xff]
    %v57 = vld [vmem:[#allocation6 + $0x18] sm:$0xff]
    %vm58 = vcmask 261120
    %v60 = vsel %vm58, %v52, 0
    %v63 = vsel %vm58, %v53, 0
    %65 = vmatprep.subr.mxu0 0.0
    %66 = vmatpush1.msra.mxu0 %v54
    %67 = vmatprep.subr.mxu0 0.0
    %68 = vmatpush1.msra.mxu0 %v55
    %69 = vmatprep.subr.mxu0 0.0
    %70 = vmatpush1.msra.mxu0 %v56
    %71 = vmatprep.subr.mxu0 0.0
    %72 = vmatpush1.msra.mxu0 %v57
    %73 = vmatprep.subr.mxu0 0.0
    %74 = vmatpush1.msra.mxu0 0.0
    %75 = vmatprep.subr.mxu0 0.0
    %76 = vmatpush1.msra.mxu0 0.0
    %77 = vmatprep.subr.mxu0 0.0
    %78 = vmatpush1.msra.mxu0 0.0
    %79 = vmatprep.subr.mxu0 0.0
    %80 = vmatpush1.msra.mxu0 0.0
    %81 = vmatprep.subr.mxu0 0.0
    %82 = vmatpush1.msra.mxu0 0.0
    %83 = vmatprep.subr.mxu0 0.0
    %84 = vmatpush1.msra.mxu0 0.0
    %85 = vmatprep.subr.mxu0 0.0
    %86 = vmatpush1.msra.mxu0 0.0
    %87 = vmatprep.subr.mxu0 0.0
    %88 = vmatpush1.msra.mxu0 0.0
    %89 = vmatprep.subr.mxu0 0.0
    %90 = vmatpush1.msra.mxu0 0.0
    %91 = vmatprep.subr.mxu0 0.0
    %92 = vmatpush1.msra.mxu0 0.0
    %93 = vmatprep.subr.mxu0 0.0
    %94 = vmatpush1.msra.mxu0 0.0
    %95 = vmatprep.subr.mxu0 0.0
    %96 = vmatpush1.msra.mxu0 0.0
    %97 = vmatprep.subr.mxu0 0.0
    %98 = vmatpush1.msra.mxu0 0.0
    %99 = vmatprep.subr.mxu0 0.0
    %100 = vmatpush1.msra.mxu0 0.0
    %101 = vmatprep.subr.mxu0 0.0
    %102 = vmatpush1.msra.mxu0 0.0
    %103 = vmatprep.subr.mxu0 0.0
    %104 = vmatpush1.msra.mxu0 0.0
    %105 = vmatprep.subr.mxu0 0.0
    %106 = vmatpush1.msra.mxu0 0.0
    %107 = vmatprep.subr.mxu0 0.0
    %108 = vmatpush1.msra.mxu0 0.0
    %109 = vmatprep.subr.mxu0 0.0
    %110 = vmatpush1.msra.mxu0 0.0
    %111 = vmatprep.subr.mxu0 0.0
    %112 = vmatpush1.msra.mxu0 0.0
    %113 = vmatprep.subr.mxu0 0.0
    %114 = vmatpush1.msra.mxu0 0.0
    %115 = vmatprep.subr.mxu0 0.0
    %116 = vmatpush1.msra.mxu0 0.0
    %117 = vmatprep.subr.mxu0 0.0
    %118 = vmatpush1.msra.mxu0 0.0
    %119 = vmatprep.subr.mxu0 0.0
    %120 = vmatpush1.msra.mxu0 0.0
    %121 = vmatprep.subr.mxu0 0.0
    %122 = vmatpush1.msra.mxu0 0.0
    %123 = vmatprep.subr.mxu0 0.0
    %124 = vmatpush1.msra.mxu0 0.0
    %125 = vmatprep.subr.mxu0 0.0
    %126 = vmatpush1.msra.mxu0 0.0
    %127 = vmatprep.subr.mxu0 0.0
    %128 = vmatpush1.msra.mxu0 0.0
    %129 = vmatprep.mubr.f32.mxu0 0.0
    %130 = vmatmul.mubr.f32.gmra.mrb[0].mxu0 %v60
    %v131 = vpop.f32.mrb[0].mxu0
    %v132 = vadd.f32 0.0, %v131
    %v133 = vpop.f32.mrb[0].mxu0
    %134 = vmatprep.mubr.f32.mxu0 0.0
    %135 = vmatmul.mubr.f32.gmra.mrb[0].mxu0 %v63
    %v136 = vpop.f32.mrb[0].mxu0
    %v137 = vadd.f32 0.0, %v136
    %v138 = vpop.f32.mrb[0].mxu0
    %139 = vdwg.mxu0
    %v140 = vadd.f32 %v50, %v132
    %v141 = vadd.f32 %v51, %v137
    %vm142 = vcmask 785408
    %143 = vst.msk [vmem:[#allocation2] sm:$0xff] %vm142, %v140
    %144 = vst.msk [vmem:[#allocation2 + $0x8] sm:$0xff] %vm142, %v141
    // Predicated region
    $region26: #{tpu_custom_call.1} parent=1 // pred_check
      %p145 = pneg %p43
    $region27: #{tpu_custom_call.1} parent=1 // pred_check_branch
      %147 = sbr.rel (%p145) target = $region29
    $region28: #{tpu_custom_call.1} parent=1 // pred_region
      %v148 = vld [vmem:[#allocation2] sm:$0xff]
      %v149 = vld [vmem:[#allocation2 + $0x8] sm:$0xff]
      %v150 = vld [vmem:[%s2] sm:$0x1]
      %v152 = vlaneseq
      %v153 = vshrl.u32 %v152, 7
      %v154 = vsub.s32 0, %v153
      %v155 = vrot.slane %v150, %v154
      %v157 = vadd.f32 %v148, %v155
      %v158 = vadd.f32 %v149, %v155
      %159 = vst.msk [vmem:[#allocation8] sm:$0xff] %vm142, %v157
      %160 = vst.msk [vmem:[#allocation8 + $0x8] sm:$0xff] %vm142, %v158
    $region29: #{tpu_custom_call.1} parent=1 // pred_fallthru
      _
    // Predicated region
    $region30: #{tpu_custom_call.1} parent=1 // pred_check
      _
    $region31: #{tpu_custom_call.1} parent=1 // pred_check_branch
      %162 = sbr.rel (0) target = $region33
    $region32: #{tpu_custom_call.1} parent=1 // pred_region
      %s164 = ssub.s32 256, 256
      %165 = vsyncadd [#allocation5], %s164
      %s166 = sshll.u32 [#allocation8], 4
      %s167 = int_to_ptr.vmem [resolvable:$true] %s166
      %172 = dma.vmem_to_hbm [thread:$0]  %s167, 256, %s3, [#allocation5], 128, 128, 8
    $region33: #{tpu_custom_call.1} parent=1 // pred_fallthru
      _
    // Predicated region
    $region34: #{tpu_custom_call.1} parent=1 // pred_check
      _
    $region35: #{tpu_custom_call.1} parent=1 // pred_check_branch
      %174 = sbr.rel (0) target = $region37
    $region36: #{tpu_custom_call.1} parent=1 // pred_region
      %175 = dma.done [#allocation5], 256
    $region37: #{tpu_custom_call.1} parent=1 // pred_fallthru
      _
    %176 = vsyncpa [#allocation4], 1
    %177 = vsyncpa [#allocation7], 1
    %178 = vsyncpa [#allocation5], 1

</llo_original>
